<compile_context>
chip_gen: v7x
topology: tpu7x:2x2x1
jax: 0.10.0
libtpu: 0.0.40
codegen_flags: <defaults>
</compile_context>

<pallas_src>
import functools

import jax
import jax.numpy as jnp
from jax import lax
from jax.experimental import pallas as pl
from jax.experimental.pallas import tpu as pltpu


def _inner_product_kernel(zl_ref, zr_ref, o_ref, *, act):
    # (tm, D) . (tn, D)^T -> (tm, tn) on the MXU, accumulated in f32.
    # dot_general with contracting dims (1, 1) lets Mosaic fold the RHS
    # transpose into the MXU feed (no (D, N) operand is ever materialized).
    acc = lax.dot_general(
        zl_ref[...],
        zr_ref[...],
        dimension_numbers=(((1,), (1,)), ((), ())),
        preferred_element_type=jnp.float32,
    )
    if act is not None:
        acc = act(acc)
    o_ref[...] = acc.astype(o_ref.dtype)


def inner_product_decoder(z, *, act=None, tile_m=512, tile_n=512):
    """adj = act(z @ z.T) via a tiled Pallas TPU kernel. z: (N, D)."""
    n, d = z.shape

    # Full-extent blocks for small N (always legal); otherwise lane-dense
    # multiples of 128 (tile_m / tile_n defaults) with masked partial edges.
    tm = n if n <= tile_m else tile_m
    tn = n if n <= tile_n else tile_n
    grid = (pl.cdiv(n, tm), pl.cdiv(n, tn))

    itemsize = jnp.dtype(z.dtype).itemsize
    cost = pl.CostEstimate(
        flops=2 * n * n * d,
        bytes_accessed=itemsize * (n * n + 2 * n * d),
        transcendentals=0,
    )

    kernel = functools.partial(_inner_product_kernel, act=act)

    return pl.pallas_call(
        kernel,
        out_shape=jax.ShapeDtypeStruct((n, n), z.dtype),
        grid_spec=pltpu.PrefetchScalarGridSpec(
            num_scalar_prefetch=0,
            grid=grid,
            in_specs=[
                # Same array fed twice: row tile i for the LHS (constant
                # across the inner j loop -> DMA reused), row tile j for the
                # RHS (contracted against its own feature dim).
                pl.BlockSpec((tm, d), lambda i, j: (i, 0)),
                pl.BlockSpec((tn, d), lambda i, j: (j, 0)),
            ],
            out_specs=pl.BlockSpec((tm, tn), lambda i, j: (i, j)),
        ),
        compiler_params=pltpu.CompilerParams(
            dimension_semantics=("parallel", "parallel"),
        ),
        cost_estimate=cost,
    )(z, z)


if __name__ == "__main__":
    key = jax.random.PRNGKey(0)

    # Tiny case matching the module's intended use (N nodes, D latent dims),
    # identity activation (the module's default).
    N, D = 8, 32
    z_small = jax.random.normal(key, (N, D), dtype=jnp.float32)
    adj_small = jax.block_until_ready(inner_product_decoder(z_small))
    ref_small = z_small @ z_small.T
    assert adj_small.shape == (N, N)
    assert jnp.allclose(adj_small, ref_small, atol=1e-5, rtol=1e-5)

    # Modest case with explicit small tiles to exercise the 2-D tiled grid
    # (grid = (2, 2)), lane-dense 128-wide output stores, plus a non-identity
    # activation to exercise the in-kernel act path.
    N2, D2 = 256, 32
    z_big = jax.random.normal(jax.random.PRNGKey(1), (N2, D2), dtype=jnp.float32)
    adj_big = jax.block_until_ready(
        inner_product_decoder(z_big, act=jax.nn.sigmoid, tile_m=128, tile_n=128)
    )
    ref_big = jax.nn.sigmoid(z_big @ z_big.T)
    assert adj_big.shape == (N2, N2)
    assert jnp.allclose(adj_big, ref_big, atol=1e-4, rtol=1e-4)

    # Non-multiple-of-tile edge case (masked partial output tiles).
    N3, D3 = 200, 48
    z_edge = jax.random.normal(jax.random.PRNGKey(2), (N3, D3), dtype=jnp.float32)
    adj_edge = jax.block_until_ready(
        inner_product_decoder(z_edge, tile_m=128, tile_n=128)
    )
    ref_edge = z_edge @ z_edge.T
    assert adj_edge.shape == (N3, N3)
    assert jnp.allclose(adj_edge, ref_edge, atol=1e-4, rtol=1e-4)

    print("KERNEL_OK")
</pallas_src>

<mosaic_0001>
module attributes {stable_mosaic.version = 11 : i64} {
  func.func @_inner_product_kernel(%arg0: i32, %arg1: i32, %arg2: memref<8x32xf32, #tpu.memory_space<vmem>>, %arg3: memref<8x32xf32, #tpu.memory_space<vmem>>, %arg4: memref<8x8xf32, #tpu.memory_space<vmem>>) attributes {dimension_semantics = [#tpu.dimension_semantics<parallel>, #tpu.dimension_semantics<parallel>], iteration_bounds = array<i64: 1, 1>, scalar_prefetch = 0 : i64, scratch_operands = 0 : i64, tpu.core_type = #tpu.core_type<tc>, window_params = [{transform_indices = @transform_0, window_bounds = array<i64: 8, 32>}, {transform_indices = @transform_1, window_bounds = array<i64: 8, 32>}, {transform_indices = @transform_2, window_bounds = array<i64: 8, 8>}]} {
    %c0 = arith.constant 0 : index
    %c0_0 = arith.constant 0 : index
    %0 = vector.load %arg2[%c0, %c0_0] : memref<8x32xf32, #tpu.memory_space<vmem>>, vector<8x32xf32>
    %c0_1 = arith.constant 0 : index
    %c0_2 = arith.constant 0 : index
    %1 = vector.load %arg3[%c0_1, %c0_2] : memref<8x32xf32, #tpu.memory_space<vmem>>, vector<8x32xf32>
    %cst = arith.constant dense<0.000000e+00> : vector<8x8xf32>
    %2 = tpu.matmul %0, %1, %cst {dimension_numbers = #tpu.dot_dimension_numbers<[1], [1], [0], [0], [0, 0, 1, 0], [], []>} : vector<8x32xf32>, vector<8x32xf32>, vector<8x8xf32> -> vector<8x8xf32>
    %c0_3 = arith.constant 0 : index
    %c0_4 = arith.constant 0 : index
    %3 = vector.load %arg4[%c0_3, %c0_4] : memref<8x8xf32, #tpu.memory_space<vmem>>, vector<8x8xf32>
    tpu.vector_store %arg4[%c0_3, %c0_4], %2 {strides = array<i32>} : memref<8x8xf32, #tpu.memory_space<vmem>>, vector<8x8xf32>,
    return
  }
  func.func @transform_0(%arg0: i32, %arg1: i32) -> (i32, i32) {
    %c0_i32 = arith.constant 0 : i32
    %c0_i32_0 = arith.constant 0 : i32
    return %arg0, %c0_i32 : i32, i32
  }
  func.func @transform_1(%arg0: i32, %arg1: i32) -> (i32, i32) {
    %c0_i32 = arith.constant 0 : i32
    %c0_i32_0 = arith.constant 0 : i32
    return %arg1, %c0_i32 : i32, i32
  }
  func.func @transform_2(%arg0: i32, %arg1: i32) -> (i32, i32) {
    %c0_i32 = arith.constant 0 : i32
    return %arg0, %arg1 : i32, i32
  }
}

</mosaic_0001>

<llo_original>
// kernel: tpu_custom_call.1
$region0: #{tpu_custom_call.1}
  #allocation0 [shape = 'u32[]', space=smem, size = 0x4, offset = 0x4, fixed_abs, tag = 'smem constant byte address 0x4 - core index']
  #allocation1 [shape = 'u32[144,128]{1,0:T(1,128)}', space=vmem, size = 0x12000, scoped, tag = 'internal scratch']
  %s0 = inlined_call_operand.hbm [shape: f32[8,32], index: 0, kind: input, shape index: {}]
  %s1 = inlined_call_operand.hbm [shape: f32[8,32], index: 1, kind: input, shape index: {}]
  %s2 = inlined_call_operand.hbm [shape: f32[8,8], index: 2, kind: output, shape index: {}]
  %s3 = sld [smem:[#allocation0]]
  $region26: #{tpu_custom_call.1} parent=0
    _
  %s5 = ssub.s32 1, %s3
  %s6 = scalar_select 0, %s5, %s3
  $region1: #{tpu_custom_call.1} parent=0
    #allocation2 [shape = 'u8[4096]{0}', space=vmem, size = 0x1000, scoped, tag = 'input window, operand 0, single buffered']
    #allocation3 [shape = 's32[1]{0}', space=sflag, size = 0x4, scoped, tag = 'scoped memory for tpu_custom_call.1']
    #allocation4 [shape = 's32[1]{0}', space=sflag, size = 0x4, scoped, tag = 'scoped memory for tpu_custom_call.1']
    #allocation5 [shape = 'u8[4096]{0}', space=vmem, size = 0x1000, scoped, tag = 'input window, operand 1, single buffered']
    #allocation6 [shape = 's32[1]{0}', space=sflag, size = 0x4, scoped, tag = 'scoped memory for tpu_custom_call.1']
    #allocation7 [shape = 'u8[4096]{0}', space=vmem, size = 0x1000, scoped, tag = 'output window, operand 0, single buffered']
    %7 = vsyncpa [#allocation3], 0
    %8 = vsyncpa [#allocation6], 0
    %9 = vsyncpa [#allocation4], 0
    // Predicated region
    $region2: #{tpu_custom_call.1} parent=1 // pred_check
      _
    $region3: #{tpu_custom_call.1} parent=1 // pred_check_branch
      %11 = sbr.rel (0) target = $region5
    $region4: #{tpu_custom_call.1} parent=1 // pred_region
      %s13 = ssub.s32 128, 128
      %14 = vsyncadd [#allocation3], %s13
      %s16 = sshll.u32 [#allocation2], 4
      %s17 = int_to_ptr.vmem [resolvable:$true] %s16
      %19 = dma.hbm_to_vmem [thread:$0]  %s0, 128, %s17, [#allocation3]
    $region5: #{tpu_custom_call.1} parent=1 // pred_fallthru
      _
    // Predicated region
    $region6: #{tpu_custom_call.1} parent=1 // pred_check
      _
    $region7: #{tpu_custom_call.1} parent=1 // pred_check_branch
      %21 = sbr.rel (0) target = $region9
    $region8: #{tpu_custom_call.1} parent=1 // pred_region
      %s23 = ssub.s32 128, 128
      %24 = vsyncadd [#allocation6], %s23
      %s26 = sshll.u32 [#allocation5], 4
      %s27 = int_to_ptr.vmem [resolvable:$true] %s26
      %29 = dma.hbm_to_vmem [thread:$0]  %s1, 128, %s27, [#allocation6]
    $region9: #{tpu_custom_call.1} parent=1 // pred_fallthru
      _
    // Predicated region
    $region10: #{tpu_custom_call.1} parent=1 // pred_check
      _
    $region11: #{tpu_custom_call.1} parent=1 // pred_check_branch
      %31 = sbr.rel (0) target = $region13
    $region12: #{tpu_custom_call.1} parent=1 // pred_region
      %32 = dma.done [#allocation3], 128
    $region13: #{tpu_custom_call.1} parent=1 // pred_fallthru
      _
    // Predicated region
    $region14: #{tpu_custom_call.1} parent=1 // pred_check
      _
    $region15: #{tpu_custom_call.1} parent=1 // pred_check_branch
      %34 = sbr.rel (0) target = $region17
    $region16: #{tpu_custom_call.1} parent=1 // pred_region
      %35 = dma.done [#allocation6], 128
    $region17: #{tpu_custom_call.1} parent=1 // pred_fallthru
      _
    %v36 = vld [vmem:[#allocation2] sm:$0xff]
    %v37 = vld [vmem:[#allocation5] sm:$0xff]
    %vm38 = vcmask 261120
    %v40 = vsel %vm38, %v36, 0
    %v43 = vsel %vm38, %v37, 0
    %45 = vmatprep.subr.mxu0 0.0
    %46 = vmatpush1.xpose.msra.mxu0 %v43
    %47 = vmatprep.subr.mxu0 0.0
    %48 = vmatpush1.xpose.msra.mxu0 0.0
    %49 = vmatprep.subr.mxu0 0.0
    %50 = vmatpush1.xpose.msra.mxu0 0.0
    %51 = vmatprep.subr.mxu0 0.0
    %52 = vmatpush1.xpose.msra.mxu0 0.0
    %53 = vmatprep.subr.mxu0 0.0
    %54 = vmatpush1.xpose.msra.mxu0 0.0
    %55 = vmatprep.subr.mxu0 0.0
    %56 = vmatpush1.xpose.msra.mxu0 0.0
    %57 = vmatprep.subr.mxu0 0.0
    %58 = vmatpush1.xpose.msra.mxu0 0.0
    %59 = vmatprep.subr.mxu0 0.0
    %60 = vmatpush1.xpose.msra.mxu0 0.0
    %61 = vmatprep.subr.mxu0 0.0
    %62 = vmatpush1.xpose.msra.mxu0 0.0
    %63 = vmatprep.subr.mxu0 0.0
    %64 = vmatpush1.xpose.msra.mxu0 0.0
    %65 = vmatprep.subr.mxu0 0.0
    %66 = vmatpush1.xpose.msra.mxu0 0.0
    %67 = vmatprep.subr.mxu0 0.0
    %68 = vmatpush1.xpose.msra.mxu0 0.0
    %69 = vmatprep.subr.mxu0 0.0
    %70 = vmatpush1.xpose.msra.mxu0 0.0
    %71 = vmatprep.subr.mxu0 0.0
    %72 = vmatpush1.xpose.msra.mxu0 0.0
    %73 = vmatprep.subr.mxu0 0.0
    %74 = vmatpush1.xpose.msra.mxu0 0.0
    %75 = vmatprep.subr.mxu0 0.0
    %76 = vmatpush1.xpose.msra.mxu0 0.0
    %77 = vmatprep.subr.mxu0 0.0
    %78 = vmatpush1.xpose.msra.mxu0 0.0
    %79 = vmatprep.subr.mxu0 0.0
    %80 = vmatpush1.xpose.msra.mxu0 0.0
    %81 = vmatprep.subr.mxu0 0.0
    %82 = vmatpush1.xpose.msra.mxu0 0.0
    %83 = vmatprep.subr.mxu0 0.0
    %84 = vmatpush1.xpose.msra.mxu0 0.0
    %85 = vmatprep.subr.mxu0 0.0
    %86 = vmatpush1.xpose.msra.mxu0 0.0
    %87 = vmatprep.subr.mxu0 0.0
    %88 = vmatpush1.xpose.msra.mxu0 0.0
    %89 = vmatprep.subr.mxu0 0.0
    %90 = vmatpush1.xpose.msra.mxu0 0.0
    %91 = vmatprep.subr.mxu0 0.0
    %92 = vmatpush1.xpose.msra.mxu0 0.0
    %93 = vmatprep.subr.mxu0 0.0
    %94 = vmatpush1.xpose.msra.mxu0 0.0
    %95 = vmatprep.subr.mxu0 0.0
    %96 = vmatpush1.xpose.msra.mxu0 0.0
    %97 = vmatprep.subr.mxu0 0.0
    %98 = vmatpush1.xpose.msra.mxu0 0.0
    %99 = vmatprep.subr.mxu0 0.0
    %100 = vmatpush1.xpose.msra.mxu0 0.0
    %101 = vmatprep.subr.mxu0 0.0
    %102 = vmatpush1.xpose.msra.mxu0 0.0
    %103 = vmatprep.subr.mxu0 0.0
    %104 = vmatpush1.xpose.msra.mxu0 0.0
    %105 = vmatprep.subr.mxu0 0.0
    %106 = vmatpush1.xpose.msra.mxu0 0.0
    %107 = vmatprep.subr.mxu0 0.0
    %108 = vmatpush1.xpose.msra.mxu0 0.0
    %109 = vmatprep.mubr.f32.mxu0 0.0
    %110 = vmatmul.mubr.f32.gmra.mrb[0].mxu0 %v40
    %v111 = vpop.f32.mrb[0].mxu0
    %v112 = vadd.f32 0.0, %v111
    %v113 = vpop.f32.mrb[0].mxu0
    %114 = vdwg.mxu0
    %vm115 = vcmask 64512
    %116 = vst.msk [vmem:[#allocation7] sm:$0xff] %vm115, %v112
    // Predicated region
    $region18: #{tpu_custom_call.1} parent=1 // pred_check
      _
    $region19: #{tpu_custom_call.1} parent=1 // pred_check_branch
      %118 = sbr.rel (0) target = $region21
    $region20: #{tpu_custom_call.1} parent=1 // pred_region
      %s120 = ssub.s32 128, 128
      %121 = vsyncadd [#allocation4], %s120
      %s123 = sshll.u32 [#allocation7], 4
      %s124 = int_to_ptr.vmem [resolvable:$true] %s123
      %126 = dma.vmem_to_hbm [thread:$0]  %s124, 128, %s2, [#allocation4]
    $region21: #{tpu_custom_call.1} parent=1 // pred_fallthru
      _
    // Predicated region
    $region22: #{tpu_custom_call.1} parent=1 // pred_check
      _
    $region23: #{tpu_custom_call.1} parent=1 // pred_check_branch
      %128 = sbr.rel (0) target = $region25
    $region24: #{tpu_custom_call.1} parent=1 // pred_region
      %129 = dma.done [#allocation4], 128
    $region25: #{tpu_custom_call.1} parent=1 // pred_fallthru
      _
    %130 = vsyncpa [#allocation3], 1
    %131 = vsyncpa [#allocation6], 1
    %132 = vsyncpa [#allocation4], 1

</llo_original>
